<compile_context>
chip_gen: v6e
topology: v6e:2x2x1
jax: 0.10.0
libtpu: 0.0.40
codegen_flags: <defaults>
</compile_context>

<pallas_src>
import functools
import math

import numpy as np
import jax
import jax.numpy as jnp
from jax.experimental import pallas as pl
from jax.experimental.pallas import tpu as pltpu


_OFFSETS = tuple((dh, dw) for dh in (-1, 0, 1) for dw in (-1, 0, 1))  # tap order = (kh, kw)


# ---------------------------------------------------------------------------
# One-time probe: pin pltpu.roll's rotation direction so the tap <-> weight
# pairing is correct regardless of the hardware/primitive convention.
# ---------------------------------------------------------------------------
@functools.cache
def _roll_sign() -> int:
    def probe(x_ref, o_ref):
        o_ref[...] = pltpu.roll(x_ref[...], 1, axis=1)

    with jax.ensure_compile_time_eval():
        x = jnp.asarray(np.broadcast_to(np.arange(128, dtype=np.float32), (8, 128)).copy())
        y = pl.pallas_call(probe, out_shape=jax.ShapeDtypeStruct((8, 128), jnp.float32))(x)
        row = np.asarray(jax.device_get(y))[0]
    # np.roll convention: roll(x, +1) sends x[0] to index 1.
    return -1 if float(row[1]) == 0.0 else +1


# ---------------------------------------------------------------------------
# In-kernel math helpers
# ---------------------------------------------------------------------------
def _gelu_erf(x):
    # Exact (erf) GELU as in nn.GELU() default.  erf via Abramowitz-Stegun 7.1.26
    # (abs err ~1.5e-7).  Exact reciprocal (cheap at these sizes; review precision note).
    z = x * 0.7071067811865476
    a = jnp.abs(z)
    t = 1.0 / (1.0 + 0.3275911 * a)
    poly = t * (0.254829592
                + t * (-0.284496736
                       + t * (1.421413741
                              + t * (-1.453152027 + t * 1.061405429))))
    erf_a = 1.0 - poly * jnp.exp(-a * a)
    erf = jnp.where(z >= 0.0, erf_a, -erf_a)
    return 0.5 * x * (1.0 + erf)


# ---------------------------------------------------------------------------
# Fused DoubleConv kernel (one grid step = B_TILE samples, fully VMEM-resident)
# ---------------------------------------------------------------------------
def _make_double_conv_kernel(W, HW, b_tile, c_mid, c_out, c_out_p, residual, roll_sign):
    N = b_tile * HW

    def conv3x3(x_bf, masks_bf, w_ref, slab_ref):
        # x_bf: [C, N] bf16.  Build im2col slab [9C, N] directly in the bf16 VMEM
        # scratch (lane roll + 0/1 mask per tap), then ONE MXU matmul
        # W[Cout_p, 9C] (bf16) @ slab (bf16) -> f32.
        # Cross-sample wrap from the flat roll only lands on masked (out-of-image)
        # positions, so folding B_TILE samples into the lane axis is exact.
        c = x_bf.shape[0]
        for t, (dh, dw) in enumerate(_OFFSETS):
            s = dh * W + dw                       # flat spatial shift of this tap
            if s == 0:
                xt = x_bf
            else:
                xt = pltpu.roll(x_bf, (roll_sign * s) % N, axis=1) * masks_bf[t:t + 1, :]
            slab_ref[t * c:(t + 1) * c, :] = xt
        return jnp.dot(w_ref[...], slab_ref[...], preferred_element_type=jnp.float32)

    def group_norm1(y, gamma, beta, c_real, eps=1e-5):
        # GroupNorm(num_groups=1): per-sample stats over (C, H*W); padded channel rows
        # are exactly zero so they add nothing to the sums; divide by the REAL count.
        inv_n = 1.0 / float(c_real * HW)
        chunks = []
        for b in range(b_tile):                   # unrolled, b_tile <= 8
            yb = y[:, b * HW:(b + 1) * HW]
            s1 = jnp.sum(jnp.sum(yb, axis=1, keepdims=True), axis=0, keepdims=True)
            s2 = jnp.sum(jnp.sum(yb * yb, axis=1, keepdims=True), axis=0, keepdims=True)
            mean = s1 * inv_n
            var = jnp.maximum(s2 * inv_n - mean * mean, 0.0)
            chunks.append((yb - mean) * jax.lax.rsqrt(var + eps))
        yn = chunks[0] if b_tile == 1 else jnp.concatenate(chunks, axis=1)
        return yn * gamma + beta

    def kernel(x_ref, m_ref, w1_ref, g1_ref, b1_ref, w2_ref, g2_ref, b2_ref,
               o_ref, slab1_ref, slab2_ref):
        masks = m_ref[...]                                      # [9, N] bf16 (0/1 exact)
        x_bf = x_ref[0].astype(jnp.bfloat16)                    # [cin_p, N]
        h = conv3x3(x_bf, masks, w1_ref, slab1_ref)             # conv1 (no bias) -> f32
        h = _gelu_erf(group_norm1(h, g1_ref[...], b1_ref[...], c_mid))     # GN1 + GELU
        y = conv3x3(h.astype(jnp.bfloat16), masks, w2_ref, slab2_ref)      # conv2
        y = group_norm1(y, g2_ref[...], b2_ref[...], c_out)                # GN2
        if residual:
            y = _gelu_erf(x_ref[0][:c_out_p, :] + y)            # F.gelu(x + dc(x)), f32 x
        o_ref[0] = y

    return kernel


# ---------------------------------------------------------------------------
# Host-side glue (layout packing only; all compute is in the kernel)
# ---------------------------------------------------------------------------
def _ru(x, m):
    return ((x + m - 1) // m) * m


def _pick_b_tile(batch, max_tile=8):
    # Fold several samples into the matmul N dim (amortizes per-grid-step overhead and
    # widens the skinny MXU matmuls) while keeping >=2 grid steps when possible so
    # v7x's two TensorCores both get work and step i+1's DMAs hide under step i.
    for cand in range(min(batch, max_tile), 0, -1):
        if batch % cand == 0 and batch // cand >= 2:
            return cand
    for cand in range(min(batch, max_tile), 0, -1):
        if batch % cand == 0:
            return cand
    return 1


def _tap_masks(H, W, b_tile):
    h = np.arange(H)[:, None]
    w = np.arange(W)[None, :]
    rows = []
    for dh, dw in _OFFSETS:
        m = (h + dh >= 0) & (h + dh < H) & (w + dw >= 0) & (w + dw < W)
        rows.append(m.reshape(-1))
    m9 = np.stack(rows, axis=0).astype(np.float32)              # [9, H*W]
    m9 = np.tile(m9, (1, b_tile))                               # [9, b_tile*H*W]
    return jnp.asarray(m9).astype(jnp.bfloat16)                 # 0/1 -> exact in bf16


def _pack_conv_weight(w_oihw, cin_p, cout_p):
    # [Cout, Cin, 3, 3] -> [Cout_p, 9*Cin_p] bf16, tap-major (kh, kw, ci) to match the
    # in-kernel im2col slab.  Padded rows/cols are zero -> no contribution.
    cout, cin, _, _ = w_oihw.shape
    w = jnp.pad(w_oihw, ((0, cout_p - cout), (0, cin_p - cin), (0, 0), (0, 0)))
    w = jnp.transpose(w, (0, 2, 3, 1)).reshape(cout_p, 9 * cin_p)
    return w.astype(jnp.bfloat16)


def _pad_rows(v, rows):
    c = v.shape[0]
    return v if c == rows else jnp.pad(v, ((0, rows - c), (0, 0)))


def _vmem_limit_bytes(cin_p, cmid_p, cout_p, N):
    f32, bf16 = 4, 2
    per_step = (
        2 * cin_p * N * f32                              # double-buffered input block
        + 2 * cout_p * N * f32                           # double-buffered output block
        + 2 * (9 * N * bf16                              # masks
               + cmid_p * 9 * cin_p * bf16               # conv1 weight
               + cout_p * 9 * cmid_p * bf16              # conv2 weight
               + 2 * (cmid_p + cout_p) * f32)            # gamma/beta
        + (9 * cin_p + 9 * cmid_p) * N * bf16            # im2col scratch slabs
        + 4 * max(cmid_p, cout_p) * N * f32              # live f32 intermediates (h, y, taps)
    )
    # Generous headroom, clamped to a value safe on every generation
    # (v5e scoped default is 16 MiB; v7x has only 64 MiB physical VMEM).
    return int(min(max(2 * per_step + (4 << 20), 16 << 20), 48 << 20))


def double_conv(x_nchw, params, residual=False, b_tile=None):
    """DoubleConv forward: x [B, Cin, H, W] f32 -> [B, Cout, H, W] f32."""
    B, Cin, H, W = x_nchw.shape
    HW = H * W
    # TODO(synk): generalize to H*W not a multiple of the 128-lane axis (needs padded lanes
    # and a spatial/halo tiling once 9*C*H*W approaches the v7x 64 MiB VMEM budget).
    assert HW % 128 == 0, "H*W must be a multiple of 128"
    w1, w2 = params["w1"], params["w2"]
    Cmid, Cout = w1.shape[0], w2.shape[0]
    assert w1.shape[1] == Cin and w2.shape[1] == Cmid
    if residual:
        assert Cin == Cout, "residual DoubleConv requires in_channels == out_channels"

    if b_tile is None:
        b_tile = _pick_b_tile(B)
    assert B % b_tile == 0
    nb = B // b_tile
    N = b_tile * HW

    # bf16 sublane-tile (16-row) alignment for every channel dim; padded rows are zero and
    # GN divides by the real channel counts, so padding is numerically inert.
    cin_p = _ru(max(Cin, 16), 16)
    cmid_p = _ru(Cmid, 16)
    cout_p = _ru(Cout, 16)

    # [B, Cin, H, W] -> [nb, cin_p, b_tile*HW]: channels on sublanes, (sample, spatial)
    # on lanes.  Layout plumbing only; all compute happens in the kernel.
    x = x_nchw.reshape(nb, b_tile, Cin, HW)
    x = jnp.transpose(x, (0, 2, 1, 3)).reshape(nb, Cin, N)
    if cin_p != Cin:
        x = jnp.pad(x, ((0, 0), (0, cin_p - Cin), (0, 0)))

    w1_k = _pack_conv_weight(w1, cin_p, cmid_p)          # [cmid_p, 9*cin_p]  bf16
    w2_k = _pack_conv_weight(w2, cmid_p, cout_p)         # [cout_p, 9*cmid_p] bf16
    g1 = _pad_rows(params["g1"], cmid_p)
    b1 = _pad_rows(params["b1"], cmid_p)
    g2 = _pad_rows(params["g2"], cout_p)
    b2 = _pad_rows(params["b2"], cout_p)
    masks = _tap_masks(H, W, b_tile)                     # [9, N] bf16

    kernel = _make_double_conv_kernel(W, HW, b_tile, Cmid, Cout, cout_p,
                                      residual, _roll_sign())

    out = pl.pallas_call(
        kernel,
        out_shape=jax.ShapeDtypeStruct((nb, cout_p, N), jnp.float32),
        grid=(nb,),
        in_specs=[
            pl.BlockSpec((1, cin_p, N), lambda i: (i, 0, 0)),    # x (B_TILE samples / step)
            pl.BlockSpec((9, N), lambda i: (0, 0)),              # tap masks (bf16, resident)
            pl.BlockSpec((cmid_p, 9 * cin_p), lambda i: (0, 0)),  # conv1 weight (bf16)
            pl.BlockSpec((cmid_p, 1), lambda i: (0, 0)),          # GN1 gamma
            pl.BlockSpec((cmid_p, 1), lambda i: (0, 0)),          # GN1 beta
            pl.BlockSpec((cout_p, 9 * cmid_p), lambda i: (0, 0)),  # conv2 weight (bf16)
            pl.BlockSpec((cout_p, 1), lambda i: (0, 0)),           # GN2 gamma
            pl.BlockSpec((cout_p, 1), lambda i: (0, 0)),           # GN2 beta
        ],
        out_specs=pl.BlockSpec((1, cout_p, N), lambda i: (i, 0, 0)),
        scratch_shapes=[
            pltpu.VMEM((9 * cin_p, N), jnp.bfloat16),   # conv1 im2col slab (reused)
            pltpu.VMEM((9 * cmid_p, N), jnp.bfloat16),  # conv2 im2col slab (reused)
        ],
        compiler_params=pltpu.CompilerParams(
            dimension_semantics=("parallel",),
            vmem_limit_bytes=_vmem_limit_bytes(cin_p, cmid_p, cout_p, N),
        ),
    )(x, masks, w1_k, g1, b1, w2_k, g2, b2)

    out = out[:, :Cout, :].reshape(nb, Cout, b_tile, HW)
    out = jnp.transpose(out, (0, 2, 1, 3)).reshape(B, Cout, H, W)
    return out


# ---------------------------------------------------------------------------
# Parameters (synthetic, deterministic) and pure-JAX reference
# ---------------------------------------------------------------------------
def init_params(key, in_channels, out_channels, mid_channels=None):
    if not mid_channels:
        mid_channels = out_channels
    ks = jax.random.split(key, 6)

    def conv_w(k, cin, cout):
        bound = 1.0 / math.sqrt(9 * cin)        # kaiming-uniform-ish, bias=False
        return jax.random.uniform(k, (cout, cin, 3, 3), jnp.float32, -bound, bound)

    return {
        "w1": conv_w(ks[0], in_channels, mid_channels),
        "g1": 1.0 + 0.1 * jax.random.normal(ks[1], (mid_channels, 1), jnp.float32),
        "b1": 0.1 * jax.random.normal(ks[2], (mid_channels, 1), jnp.float32),
        "w2": conv_w(ks[3], mid_channels, out_channels),
        "g2": 1.0 + 0.1 * jax.random.normal(ks[4], (out_channels, 1), jnp.float32),
        "b2": 0.1 * jax.random.normal(ks[5], (out_channels, 1), jnp.float32),
    }


def double_conv_reference(x, params, residual=False):
    """Pure-JAX f32 reference mirroring the PyTorch module."""
    def conv(x, w):
        return jax.lax.conv_general_dilated(
            x, w, window_strides=(1, 1), padding=((1, 1), (1, 1)),
            dimension_numbers=("NCHW", "OIHW", "NCHW"),
            precision=jax.lax.Precision.HIGHEST)

    def gn(y, g, b):
        mean = jnp.mean(y, axis=(1, 2, 3), keepdims=True)
        var = jnp.mean(jnp.square(y - mean), axis=(1, 2, 3), keepdims=True)
        yn = (y - mean) * jax.lax.rsqrt(var + 1e-5)
        return yn * g.reshape(1, -1, 1, 1) + b.reshape(1, -1, 1, 1)

    h = jax.nn.gelu(gn(conv(x, params["w1"]), params["g1"], params["b1"]),
                    approximate=False)
    y = gn(conv(h, params["w2"]), params["g2"], params["b2"])
    return jax.nn.gelu(x + y, approximate=False) if residual else y


if __name__ == "__main__":
    key = jax.random.PRNGKey(0)
    k1, k2, k3, k4 = jax.random.split(key, 4)

    # Tolerance documents the bf16-matmul-operand (f32-accumulate) tradeoff vs the
    # Precision.HIGHEST f32 reference; GN/GELU math stays f32 in-kernel.
    TOL = 5e-2

    # 1) plain DoubleConv(in_channels=4, out_channels=32), 16x16 grid, batch 2
    B, Cin, Cout, H, W = 2, 4, 32, 16, 16
    x = jax.random.normal(k1, (B, Cin, H, W), jnp.float32)
    params = init_params(k2, Cin, Cout)
    out = jax.block_until_ready(double_conv(x, params, residual=False))
    assert out.shape == (B, Cout, H, W), out.shape
    ref = double_conv_reference(x, params, residual=False)
    err = float(jnp.max(jnp.abs(out - ref)) / (jnp.max(jnp.abs(ref)) + 1e-6))
    assert err < TOL, f"plain DoubleConv mismatch: rel max err = {err:.3e}"

    # 2) residual DoubleConv(32, 32, residual=True), batch 4 (exercises the batched
    #    B_TILE=2 lane-folded path).
    B2, C = 4, 32
    x2 = jax.random.normal(k3, (B2, C, H, W), jnp.float32)
    params2 = init_params(k4, C, C)
    out2 = jax.block_until_ready(double_conv(x2, params2, residual=True))
    assert out2.shape == (B2, C, H, W), out2.shape
    ref2 = double_conv_reference(x2, params2, residual=True)
    err2 = float(jnp.max(jnp.abs(out2 - ref2)) / (jnp.max(jnp.abs(ref2)) + 1e-6))
    assert err2 < TOL, f"residual DoubleConv mismatch: rel max err = {err2:.3e}"

    print("KERNEL_OK")
</pallas_src>

<mosaic_0001>
module attributes {stable_mosaic.version = 11 : i64} {
  func.func @probe(%arg0: memref<8x128xf32, #tpu.memory_space<vmem>>, %arg1: memref<8x128xf32, #tpu.memory_space<vmem>>) attributes {dimension_semantics = [], scalar_prefetch = 0 : i64, scratch_operands = 0 : i64, tpu.core_type = #tpu.core_type<tc>} {
    %c0 = arith.constant 0 : index
    %c0_0 = arith.constant 0 : index
    %0 = vector.load %arg0[%c0, %c0_0] : memref<8x128xf32, #tpu.memory_space<vmem>>, vector<8x128xf32>
    %c1_i32 = arith.constant 1 : i32
    %1 = tpu.dynamic_rotate %0 by %c1_i32 dim 1 : vector<8x128xf32>, i32 -> vector<8x128xf32>
    %c0_1 = arith.constant 0 : index
    %c0_2 = arith.constant 0 : index
    %2 = vector.load %arg1[%c0_1, %c0_2] : memref<8x128xf32, #tpu.memory_space<vmem>>, vector<8x128xf32>
    tpu.vector_store %arg1[%c0_1, %c0_2], %1 {strides = array<i32>} : memref<8x128xf32, #tpu.memory_space<vmem>>, vector<8x128xf32>,
    return
  }
}

</mosaic_0001>

<llo_original>
// kernel: tpu_custom_call.1
$region0: #{tpu_custom_call.1}
  #allocation0 [shape = 'u32[]', space=smem, size = 0x4, offset = 0x4, fixed_abs, tag = 'smem constant byte address 0x4 - core index']
  #allocation1 [shape = 'u32[144,128]{1,0:T(1,128)}', space=vmem, size = 0x12000, scoped, tag = 'internal scratch']
  %s0 = inlined_call_operand.hbm [shape: f32[8,128], index: 0, kind: input, shape index: {}]
  %s1 = inlined_call_operand.hbm [shape: f32[8,128], index: 1, kind: output, shape index: {}]
  %s2 = sld [smem:[#allocation0]]
  $region18: #{tpu_custom_call.1} parent=0
    _
  %s4 = ssub.s32 1, %s2
  %s5 = scalar_select 0, %s4, %s2
  $region1: #{tpu_custom_call.1} parent=0
    #allocation2 [shape = 'u8[4096]{0}', space=vmem, size = 0x1000, scoped, tag = 'input window, operand 0, single buffered']
    #allocation3 [shape = 's32[1]{0}', space=sflag, size = 0x4, scoped, tag = 'scoped memory for tpu_custom_call.1']
    #allocation4 [shape = 's32[1]{0}', space=sflag, size = 0x4, scoped, tag = 'scoped memory for tpu_custom_call.1']
    #allocation5 [shape = 'u8[4096]{0}', space=vmem, size = 0x1000, scoped, tag = 'output window, operand 0, single buffered']
    %6 = vsyncpa [#allocation3], 0
    %7 = vsyncpa [#allocation4], 0
    // Predicated region
    $region2: #{tpu_custom_call.1} parent=1 // pred_check
      _
    $region3: #{tpu_custom_call.1} parent=1 // pred_check_branch
      %9 = sbr.rel (0) target = $region5
    $region4: #{tpu_custom_call.1} parent=1 // pred_region
      %s11 = ssub.s32 128, 128
      %12 = vsyncadd [#allocation3], %s11
      %s14 = sshll.u32 [#allocation2], 4
      %s15 = int_to_ptr.vmem [resolvable:$true] %s14
      %17 = dma.hbm_to_vmem [thread:$0]  %s0, 128, %s15, [#allocation3]
    $region5: #{tpu_custom_call.1} parent=1 // pred_fallthru
      _
    // Predicated region
    $region6: #{tpu_custom_call.1} parent=1 // pred_check
      _
    $region7: #{tpu_custom_call.1} parent=1 // pred_check_branch
      %19 = sbr.rel (0) target = $region9
    $region8: #{tpu_custom_call.1} parent=1 // pred_region
      %20 = dma.done [#allocation3], 128
    $region9: #{tpu_custom_call.1} parent=1 // pred_fallthru
      _
    %v21 = vld [vmem:[#allocation2] sm:$0xff]
    %22 = vrot.lane.b32.xlu0 %v21, 1
    %v23 = vpop.permute.xlu0 %22
    %24 = vst [vmem:[#allocation5] sm:$0xff] %v23
    // Predicated region
    $region10: #{tpu_custom_call.1} parent=1 // pred_check
      _
    $region11: #{tpu_custom_call.1} parent=1 // pred_check_branch
      %26 = sbr.rel (0) target = $region13
    $region12: #{tpu_custom_call.1} parent=1 // pred_region
      %s28 = ssub.s32 128, 128
      %29 = vsyncadd [#allocation4], %s28
      %s31 = sshll.u32 [#allocation5], 4
      %s32 = int_to_ptr.vmem [resolvable:$true] %s31
      %34 = dma.vmem_to_hbm [thread:$0]  %s32, 128, %s1, [#allocation4]
    $region13: #{tpu_custom_call.1} parent=1 // pred_fallthru
      _
    // Predicated region
    $region14: #{tpu_custom_call.1} parent=1 // pred_check
      _
    $region15: #{tpu_custom_call.1} parent=1 // pred_check_branch
      %36 = sbr.rel (0) target = $region17
    $region16: #{tpu_custom_call.1} parent=1 // pred_region
      %37 = dma.done [#allocation4], 128
    $region17: #{tpu_custom_call.1} parent=1 // pred_fallthru
      _
    %38 = vsyncpa [#allocation3], 1
    %39 = vsyncpa [#allocation4], 1

</llo_original>
